<compile_context>
chip_gen: v7x
topology: tpu7x:2x2x1
jax: 0.10.0
libtpu: 0.0.40
codegen_flags: <defaults>
</compile_context>

<pallas_src>
from functools import partial

import jax
import jax.numpy as jnp
from jax.experimental import pallas as pl
from jax.experimental.pallas import tpu as pltpu


# ----------------------------- kernel bodies ------------------------------ #

def _conv1x1_bias_kernel(x_ref, w_ref, b_ref, o_ref):
    # x_ref: (C_in, T), w_ref: (C_out, C_in), b_ref: (C_out, 1) f32, o_ref: (C_out, T)
    acc = jnp.dot(w_ref[...], x_ref[...], preferred_element_type=jnp.float32)
    o_ref[...] = (acc + b_ref[...]).astype(o_ref.dtype)


def _conv1x1_kernel(x_ref, w_ref, o_ref):
    o_ref[...] = jnp.dot(
        w_ref[...], x_ref[...], preferred_element_type=jnp.float32
    ).astype(o_ref.dtype)


def _conv1x1_kacc_bias_kernel(x_ref, w_ref, b_ref, o_ref, acc_ref):
    # C_in-tiled reduction: x_ref (tk, T), w_ref (C_out, tk), acc_ref (C_out, T) f32.
    k = pl.program_id(2)

    @pl.when(k == 0)
    def _():
        acc_ref[...] = jnp.zeros_like(acc_ref)

    acc_ref[...] += jnp.dot(w_ref[...], x_ref[...], preferred_element_type=jnp.float32)

    @pl.when(k == pl.num_programs(2) - 1)
    def _():
        o_ref[...] = (acc_ref[...] + b_ref[...]).astype(o_ref.dtype)


def _conv1x1_kacc_kernel(x_ref, w_ref, o_ref, acc_ref):
    k = pl.program_id(2)

    @pl.when(k == 0)
    def _():
        acc_ref[...] = jnp.zeros_like(acc_ref)

    acc_ref[...] += jnp.dot(w_ref[...], x_ref[...], preferred_element_type=jnp.float32)

    @pl.when(k == pl.num_programs(2) - 1)
    def _():
        o_ref[...] = acc_ref[...].astype(o_ref.dtype)


# ----------------------------- sizing helpers ------------------------------ #

def _tpu_vmem_bytes():
    """Physical VMEM per TensorCore; conservative fallback (v7x) if unknown."""
    try:
        info = pltpu.get_tpu_info()
        v = getattr(info, "vmem_capacity_bytes", None)
        if v:
            return int(v)
    except Exception:
        pass
    return 64 << 20


def _round_lanes(t):
    """Lane-dense rounding: multiples of 256 when big (v6e/v7x MXU), else 128."""
    if t >= 512:
        return (t // 256) * 256
    return max(128, (t // 128) * 128)


def _choose_spatial_tile(hw, c_in, c_out, itemsize, budget_bytes):
    """Spatial tile for the weight-resident path.

    Target ~4 MiB of streamed (x + out) traffic per grid step so the ~0.35us
    per-step overhead is negligible; cap only by the VMEM budget and HW.
    """
    per_col = 2 * (c_in + c_out) * itemsize          # double-buffered x + out blocks
    max_cols = max(128, budget_bytes // max(per_col, 1))
    target_cols = max(128, (4 << 20) // max((c_in + c_out) * itemsize, 1))
    tile = min(max_cols, target_cols)
    if tile >= hw:
        # Single full-extent spatial block (always legal, no padding/masking games).
        # TODO(synk): for tiny feature maps (HW < 128) with many images, pack several
        #             batch elements into the lane axis to avoid masked vst.msk stores.
        return hw
    return _round_lanes(tile)


def _choose_k_tile(c_in, c_out, itemsize, budget_bytes, force_small=False):
    """C_in tile (multiple of 128) for the reduction path."""
    if force_small:
        return 128
    max_tk = (budget_bytes // 4) // max(2 * c_out * itemsize, 1)   # dbl-buffered w blocks
    max_tk = max(128, (max_tk // 128) * 128)
    tk = min(max_tk, pl.cdiv(c_in, 128) * 128, 512)
    return max(128, tk)


def _choose_spatial_tile_k(hw, tk, c_out, itemsize, budget_bytes):
    """Spatial tile for the C_in-tiled path (accounts for the f32 accumulator)."""
    per_col = 2 * tk * itemsize + 2 * c_out * itemsize + 4 * c_out
    max_cols = max(128, budget_bytes // max(per_col, 1))
    target_cols = max(128, (4 << 20) // max((tk + c_out) * itemsize, 1))
    tile = min(max_cols, target_cols)
    if tile >= hw:
        return hw
    return _round_lanes(tile)


# ------------------------------- entry point ------------------------------- #

@partial(jax.jit, static_argnames=("force_k_tiling",))
def fc_with_conv(x_nchw, weight, bias=None, *, force_k_tiling=False):
    """1x1 Conv2d forward (PyTorch NCHW / (C_out, C_in, 1, 1) conventions)."""
    N, C_in, H, W = x_nchw.shape
    C_out = weight.shape[0]
    HW = H * W
    dtype = x_nchw.dtype
    itemsize = dtype.itemsize

    # Free reshapes (no data movement): NCHW -> (N, C_in, H*W); weight -> (C_out, C_in).
    x3 = x_nchw.reshape(N, C_in, HW)
    w_mat = weight.reshape(C_out, C_in).astype(dtype)

    total_vmem = _tpu_vmem_bytes()
    budget = min(40 << 20, total_vmem // 3)           # ~40 MiB v5e/v6e, ~21 MiB v7x
    vmem_cap = max(32 << 20, int(total_vmem * 0.8))   # ~102 MiB v5e/v6e, ~51 MiB v7x

    w_bytes = C_out * C_in * itemsize + 4 * C_out     # resident weight + f32 bias column
    resident_ok = (not force_k_tiling) and (w_bytes <= budget // 2)

    if resident_ok:
        # ---------------- weight-resident path ---------------- #
        T = _choose_spatial_tile(HW, C_in, C_out, itemsize, budget - w_bytes)
        grid = (pl.cdiv(HW, T), N)                    # spatial first: megacore work even at N=1

        x_spec = pl.BlockSpec((None, C_in, T), lambda s, n: (n, 0, s))
        w_spec = pl.BlockSpec((C_out, C_in), lambda s, n: (0, 0))       # grid-invariant, resident
        o_spec = pl.BlockSpec((None, C_out, T), lambda s, n: (n, 0, s))  # lane-dense stores
        out_shape = jax.ShapeDtypeStruct((N, C_out, HW), dtype)

        est = 2 * (C_in + C_out) * T * itemsize + w_bytes
        cparams = pltpu.CompilerParams(
            dimension_semantics=("parallel", "parallel"),
            vmem_limit_bytes=int(min(vmem_cap, max(8 << 20, est * 5 // 4))),
        )

        if bias is not None:
            b_col = bias.reshape(C_out, 1).astype(jnp.float32)
            b_spec = pl.BlockSpec((C_out, 1), lambda s, n: (0, 0))
            y3 = pl.pallas_call(
                _conv1x1_bias_kernel,
                out_shape=out_shape,
                grid=grid,
                in_specs=[x_spec, w_spec, b_spec],
                out_specs=o_spec,
                compiler_params=cparams,
            )(x3, w_mat, b_col)
        else:
            y3 = pl.pallas_call(
                _conv1x1_kernel,
                out_shape=out_shape,
                grid=grid,
                in_specs=[x_spec, w_spec],
                out_specs=o_spec,
                compiler_params=cparams,
            )(x3, w_mat)
    else:
        # ---------------- C_in-tiled reduction path (large weights / v7x) ---------------- #
        tk = _choose_k_tile(C_in, C_out, itemsize, budget, force_small=force_k_tiling)
        C_in_pad = pl.cdiv(C_in, tk) * tk
        if C_in_pad != C_in:
            # Zero-pad the contraction axis only (zeros contribute nothing to the sum).
            x3 = jnp.pad(x3, ((0, 0), (0, C_in_pad - C_in), (0, 0)))
            w_mat = jnp.pad(w_mat, ((0, 0), (0, C_in_pad - C_in)))

        w_block_bytes = 2 * C_out * tk * itemsize + 4 * C_out
        T = _choose_spatial_tile_k(HW, tk, C_out, itemsize, budget - w_block_bytes)
        grid = (pl.cdiv(HW, T), N, C_in_pad // tk)    # reduction axis innermost ("arbitrary")

        x_spec = pl.BlockSpec((None, tk, T), lambda s, n, k: (n, k, s))
        w_spec = pl.BlockSpec((C_out, tk), lambda s, n, k: (0, k))
        o_spec = pl.BlockSpec((None, C_out, T), lambda s, n, k: (n, 0, s))
        out_shape = jax.ShapeDtypeStruct((N, C_out, HW), dtype)
        scratch = [pltpu.VMEM((C_out, T), jnp.float32)]

        est = (2 * tk * T + 2 * C_out * tk + 2 * C_out * T) * itemsize \
            + 4 * C_out * T + 4 * C_out
        cparams = pltpu.CompilerParams(
            dimension_semantics=("parallel", "parallel", "arbitrary"),
            vmem_limit_bytes=int(min(vmem_cap, max(8 << 20, est * 5 // 4))),
        )

        if bias is not None:
            b_col = bias.reshape(C_out, 1).astype(jnp.float32)
            b_spec = pl.BlockSpec((C_out, 1), lambda s, n, k: (0, 0))
            y3 = pl.pallas_call(
                _conv1x1_kacc_bias_kernel,
                out_shape=out_shape,
                grid=grid,
                in_specs=[x_spec, w_spec, b_spec],
                out_specs=o_spec,
                scratch_shapes=scratch,
                compiler_params=cparams,
            )(x3, w_mat, b_col)
        else:
            y3 = pl.pallas_call(
                _conv1x1_kacc_kernel,
                out_shape=out_shape,
                grid=grid,
                in_specs=[x_spec, w_spec],
                out_specs=o_spec,
                scratch_shapes=scratch,
                compiler_params=cparams,
            )(x3, w_mat)

    return y3.reshape(N, C_out, H, W)


# ----------------------------------- demo ---------------------------------- #

if __name__ == "__main__":
    key = jax.random.PRNGKey(0)
    kx, kw, kb, kx2, kw2, kx3, kw3, kb3 = jax.random.split(key, 8)

    # FCWithConv(dim1, dim2, dim3, use_bias): 1x1 conv maps dim2 -> dim3 channels.
    N, C_in, C_out, H, W = 2, 4, 8, 16, 16
    x = jax.random.normal(kx, (N, C_in, H, W), dtype=jnp.float32)
    weight = jax.random.normal(kw, (C_out, C_in, 1, 1), dtype=jnp.float32) * 0.1
    bias = jax.random.normal(kb, (C_out,), dtype=jnp.float32) * 0.1

    out = jax.block_until_ready(fc_with_conv(x, weight, bias))
    ref = jnp.einsum("nchw,oc->nohw", x, weight.reshape(C_out, C_in),
                     precision=jax.lax.Precision.HIGHEST)
    ref = ref + bias[None, :, None, None]
    assert out.shape == (N, C_out, H, W)
    assert jnp.allclose(out, ref, atol=1e-4, rtol=1e-4)

    # Ragged spatial (H*W not a multiple of 128), odd channels, no bias.
    N2, Ci2, Co2, H2, W2 = 1, 3, 5, 15, 15
    x2 = jax.random.normal(kx2, (N2, Ci2, H2, W2), dtype=jnp.float32)
    w2 = jax.random.normal(kw2, (Co2, Ci2, 1, 1), dtype=jnp.float32) * 0.1
    out2 = jax.block_until_ready(fc_with_conv(x2, w2, None))
    ref2 = jnp.einsum("nchw,oc->nohw", x2, w2.reshape(Co2, Ci2),
                      precision=jax.lax.Precision.HIGHEST)
    assert out2.shape == (N2, Co2, H2, W2)
    assert jnp.allclose(out2, ref2, atol=1e-4, rtol=1e-4)

    # Exercise the C_in-tiled accumulator path (large-weight / v7x path) at small scale:
    # ragged C_in (zero-padded to a 128 multiple), multi-step reduction, small spatial, bias.
    N3, Ci3, Co3, H3, W3 = 2, 200, 16, 9, 9
    x3 = jax.random.normal(kx3, (N3, Ci3, H3, W3), dtype=jnp.float32)
    w3 = jax.random.normal(kw3, (Co3, Ci3, 1, 1), dtype=jnp.float32) * 0.05
    b3 = jax.random.normal(kb3, (Co3,), dtype=jnp.float32) * 0.1
    out3 = jax.block_until_ready(fc_with_conv(x3, w3, b3, force_k_tiling=True))
    ref3 = jnp.einsum("nchw,oc->nohw", x3, w3.reshape(Co3, Ci3),
                      precision=jax.lax.Precision.HIGHEST)
    ref3 = ref3 + b3[None, :, None, None]
    assert out3.shape == (N3, Co3, H3, W3)
    assert jnp.allclose(out3, ref3, atol=1e-3, rtol=1e-3)

    print("KERNEL_OK")
</pallas_src>

<mosaic_0001>
module attributes {stable_mosaic.version = 11 : i64} {
  func.func @_conv1x1_bias_kernel(%arg0: i32, %arg1: i32, %arg2: memref<1x4x256xf32, #tpu.memory_space<vmem>>, %arg3: memref<8x4xf32, #tpu.memory_space<vmem>>, %arg4: memref<8x1xf32, #tpu.memory_space<vmem>>, %arg5: memref<1x8x256xf32, #tpu.memory_space<vmem>>) attributes {dimension_semantics = [#tpu.dimension_semantics<parallel>, #tpu.dimension_semantics<parallel>], iteration_bounds = array<i64: 1, 2>, scalar_prefetch = 0 : i64, scratch_operands = 0 : i64, tpu.core_type = #tpu.core_type<tc>, window_params = [{transform_indices = @transform_0, window_bounds = array<i64: 1, 4, 256>}, {pipeline_mode = #tpu.pipeline_mode<synchronous>, transform_indices = @transform_1, window_bounds = array<i64: 8, 4>}, {pipeline_mode = #tpu.pipeline_mode<synchronous>, transform_indices = @transform_2, window_bounds = array<i64: 8, 1>}, {transform_indices = @transform_3, window_bounds = array<i64: 1, 8, 256>}]} {
    %c0 = arith.constant 0 : index
    %c0_0 = arith.constant 0 : index
    %0 = vector.load %arg3[%c0, %c0_0] : memref<8x4xf32, #tpu.memory_space<vmem>>, vector<8x4xf32>
    %c0_1 = arith.constant 0 : index
    %c0_2 = arith.constant 0 : index
    %c0_3 = arith.constant 0 : index
    %1 = vector.load %arg2[%c0_1, %c0_2, %c0_3] : memref<1x4x256xf32, #tpu.memory_space<vmem>>, vector<1x4x256xf32>
    %2 = vector.shape_cast %1 : vector<1x4x256xf32> to vector<4x256xf32>
    %cst = arith.constant dense<0.000000e+00> : vector<8x256xf32>
    %3 = tpu.matmul %0, %2, %cst {dimension_numbers = #tpu.dot_dimension_numbers<[1], [0], [0], [1], [0, 0, 1, 1], [], []>} : vector<8x4xf32>, vector<4x256xf32>, vector<8x256xf32> -> vector<8x256xf32>
    %c0_4 = arith.constant 0 : index
    %c0_5 = arith.constant 0 : index
    %4 = vector.load %arg4[%c0_4, %c0_5] : memref<8x1xf32, #tpu.memory_space<vmem>>, vector<8x1xf32>
    %5 = vector.broadcast %4 : vector<8x1xf32> to vector<8x256xf32>
    %6 = arith.addf %3, %5 : vector<8x256xf32>
    %c0_6 = arith.constant 0 : index
    %c0_7 = arith.constant 0 : index
    %c0_8 = arith.constant 0 : index
    %7 = vector.load %arg5[%c0_6, %c0_7, %c0_8] : memref<1x8x256xf32, #tpu.memory_space<vmem>>, vector<1x8x256xf32>
    %8 = vector.shape_cast %7 : vector<1x8x256xf32> to vector<8x256xf32>
    %9 = vector.shape_cast %6 : vector<8x256xf32> to vector<1x8x256xf32>
    tpu.vector_store %arg5[%c0_6, %c0_7, %c0_8], %9 {strides = array<i32>} : memref<1x8x256xf32, #tpu.memory_space<vmem>>, vector<1x8x256xf32>,
    return
  }
  func.func @transform_0(%arg0: i32, %arg1: i32) -> (i32, i32, i32) {
    %c0_i32 = arith.constant 0 : i32
    %c0_i32_0 = arith.constant 0 : i32
    return %arg1, %c0_i32, %arg0 : i32, i32, i32
  }
  func.func @transform_1(%arg0: i32, %arg1: i32) -> (i32, i32) {
    %c0_i32 = arith.constant 0 : i32
    %c0_i32_0 = arith.constant 0 : i32
    %c0_i32_1 = arith.constant 0 : i32
    return %c0_i32, %c0_i32_0 : i32, i32
  }
  func.func @transform_2(%arg0: i32, %arg1: i32) -> (i32, i32) {
    %c0_i32 = arith.constant 0 : i32
    %c0_i32_0 = arith.constant 0 : i32
    %c0_i32_1 = arith.constant 0 : i32
    return %c0_i32, %c0_i32_0 : i32, i32
  }
  func.func @transform_3(%arg0: i32, %arg1: i32) -> (i32, i32, i32) {
    %c0_i32 = arith.constant 0 : i32
    %c0_i32_0 = arith.constant 0 : i32
    return %arg1, %c0_i32, %arg0 : i32, i32, i32
  }
}

</mosaic_0001>

<llo_original>
// kernel: fc_with_conv.1
$region0: #{fc_with_conv.1}
  #allocation0 [shape = 'u32[]', space=smem, size = 0x4, offset = 0x4, fixed_abs, tag = 'smem constant byte address 0x4 - core index']
  #allocation1 [shape = 'u32[144,128]{1,0:T(1,128)}', space=vmem, size = 0x12000, scoped, tag = 'internal scratch']
  %s0 = inlined_call_operand.vmem [shape: f32[2,4,256], index: 0, kind: input, shape index: {}]
  %s1 = inlined_call_operand.vmem [shape: f32[8,4], index: 1, kind: input, shape index: {}]
  %s2 = inlined_call_operand.vmem [shape: f32[8,1], index: 2, kind: input, shape index: {}]
  %s3 = inlined_call_operand.vmem [shape: f32[2,8,256], index: 3, kind: output, shape index: {}]
  %s4 = sld [smem:[#allocation0]]
  $region45: #{fc_with_conv.1} parent=0
    _
  %s6 = ssub.s32 1, %s4
  %s7 = scalar_select 0, %s6, %s4
  loop: start=0, step=1, limit=4
  $region2: #{fc_with_conv.1} parent=0 // loop_pre_header
    _
  $region3: #{fc_with_conv.1} parent=0 // loop_header
    %s9 = sphi 0, %s13
    %p10 = scmp.ge.s32.totalorder %s9, 4
    %s16 = sphi 0, %s28
    %s17 = sphi 0, %s24
    %s18 = sphi 0, %s16
    %s19 = sphi 0, %s17
    %s20 = sphi 0, %s18
    %s21 = sphi 0, %s19
    %s33 = sphi 0, %s35
    %s36 = sphi 0, %s33
    %s37 = sphi 0, %s36
    %s53 = sphi 0, %s37
    %s57 = sphi 0, %s57
    %s59 = sphi 0, %s57
    %s60 = sphi 0, %s59
    %s74 = sphi 0, %s60
    %s78 = sphi 0, %s78
    %s80 = sphi 0, %s78
    %s81 = sphi 0, %s80
    %s95 = sphi 0, %s81
    %s103 = sphi 0, %s105
    %s106 = sphi 0, %s103
    %s107 = sphi 0, %s106
    %s123 = sphi 0, %s107
  $region4: #{fc_with_conv.1} parent=0 // loop_header_branch
    %12 = sbr.rel (%p10) target = $region8
  $region5: #{fc_with_conv.1} parent=0 // loop_body
    %s14 = ssub.s32 %s9, 1
    %s15 = ssub.s32 %s9, 2
    %s22 = sadd.s32 1, %s17
    %p23 = scmp.ge.s32.totalorder %s22, 2
    %s24 = scalar_select %p23, 0, %s22
    %s25 = sadd.s32 1, %s16
    %s26 = scalar_select %p23, %s25, %s16
    %p27 = scmp.ge.s32.totalorder %s26, 1
    %s28 = scalar_select %p27, 0, %s26
    %s29 = ssub.s32 %s17, %s24
    %s30 = ssub.s32 %s16, %s28
    %s31 = sor.u32 %s29, %s30
    %p32 = scmp.eq.s32.totalorder %s31, 0
    %s34 = sadd.s32 %s33, 1
    %s35 = scalar_select %p32, %s33, %s34
    %p38 = pneg %p32
    %p39 = scmp.eq.s32.totalorder %s9, 1
    %p40 = por %p38, %p39
    %p41 = scmp.ne.s32.totalorder %s33, %s36
    %p42 = scmp.eq.s32.totalorder %s9, 0
    %p43 = por %p41, %p42
    %p44 = scmp.ne.s32.totalorder %s33, %s36
    %p45 = scmp.eq.s32.totalorder %s14, 1
    %p46 = por %p44, %p45
    %p47 = scmp.ne.s32.totalorder %s36, %s37
    %p48 = scmp.eq.s32.totalorder %s14, 0
    %p49 = por %p47, %p48
    %p50 = scmp.ne.s32.totalorder %s36, %s37
    %p51 = scmp.eq.s32.totalorder %s15, 1
    %p52 = por %p50, %p51
    %p54 = scmp.ne.s32.totalorder %s37, %s53
    %p55 = scmp.eq.s32.totalorder %s15, 0
    %p56 = por %p54, %p55
    %s58 = sadd.s32 %s57, 1
    %p61 = scmp.eq.s32.totalorder %s9, 1
    %p62 = scmp.ne.s32.totalorder %s57, %s59
    %p63 = scmp.eq.s32.totalorder %s9, 0
    %p64 = por %p62, %p63
    %p65 = scmp.ne.s32.totalorder %s57, %s59
    %p66 = scmp.eq.s32.totalorder %s14, 1
    %p67 = por %p65, %p66
    %p68 = scmp.ne.s32.totalorder %s59, %s60
    %p69 = scmp.eq.s32.totalorder %s14, 0
    %p70 = por %p68, %p69
    %p71 = scmp.ne.s32.totalorder %s59, %s60
    %p72 = scmp.eq.s32.totalorder %s15, 1
    %p73 = por %p71, %p72
    %p75 = scmp.ne.s32.totalorder %s60, %s74
    %p76 = scmp.eq.s32.totalorder %s15, 0
    %p77 = por %p75, %p76
    %s79 = sadd.s32 %s78, 1
    %p82 = scmp.eq.s32.totalorder %s9, 1
    %p83 = scmp.ne.s32.totalorder %s78, %s80
    %p84 = scmp.eq.s32.totalorder %s9, 0
    %p85 = por %p83, %p84
    %p86 = scmp.ne.s32.totalorder %s78, %s80
    %p87 = scmp.eq.s32.totalorder %s14, 1
    %p88 = por %p86, %p87
    %p89 = scmp.ne.s32.totalorder %s80, %s81
    %p90 = scmp.eq.s32.totalorder %s14, 0
    %p91 = por %p89, %p90
    %p92 = scmp.ne.s32.totalorder %s80, %s81
    %p93 = scmp.eq.s32.totalorder %s15, 1
    %p94 = por %p92, %p93
    %p96 = scmp.ne.s32.totalorder %s81, %s95
    %p97 = scmp.eq.s32.totalorder %s15, 0
    %p98 = por %p96, %p97
    %s99 = ssub.s32 %s17, %s24
    %s100 = ssub.s32 %s16, %s28
    %s101 = sor.u32 %s99, %s100
    %p102 = scmp.eq.s32.totalorder %s101, 0
    %s104 = sadd.s32 %s103, 1
    %s105 = scalar_select %p102, %s103, %s104
    %p108 = pneg %p102
    %p109 = scmp.eq.s32.totalorder %s9, 1
    %p110 = por %p108, %p109
    %p111 = scmp.ne.s32.totalorder %s103, %s106
    %p112 = scmp.eq.s32.totalorder %s9, 0
    %p113 = por %p111, %p112
    %p114 = scmp.ne.s32.totalorder %s103, %s106
    %p115 = scmp.eq.s32.totalorder %s14, 1
    %p116 = por %p114, %p115
    %p117 = scmp.ne.s32.totalorder %s106, %s107
    %p118 = scmp.eq.s32.totalorder %s14, 0
    %p119 = por %p117, %p118
    %p120 = scmp.ne.s32.totalorder %s106, %s107
    %p121 = scmp.eq.s32.totalorder %s15, 1
    %p122 = por %p120, %p121
    %p124 = scmp.ne.s32.totalorder %s107, %s123
    %p125 = scmp.eq.s32.totalorder %s15, 0
    %p126 = por %p124, %p125
    %p127 = scmp.le.s32.totalorder 1, %s9
    %p128 = scmp.lt.s32.totalorder %s9, 3
    %p129 = pnand %p127, %p128
    %p130 = pneg %p129
    // Predicated region
    $region9: #{fc_with_conv.1} parent=5 // pred_check
      _
    $region10: #{fc_with_conv.1} parent=5 // pred_check_branch
      %132 = sbr.rel (%p129) target = $region12
    $region11: #{fc_with_conv.1} parent=5 // pred_region
      %s133 = ssub.s32 %s9, 1
      // Predicated region
      $region13: #{fc_with_conv.1} parent=11 // pred_check
        %p134 = pneg %p70
      $region14: #{fc_with_conv.1} parent=11 // pred_check_branch
        %136 = sbr.rel (%p134) target = $region16
      $region15: #{fc_with_conv.1} parent=11 // pred_region
        _
      $region16: #{fc_with_conv.1} parent=11 // pred_fallthru
        _
      // Predicated region
      $region17: #{fc_with_conv.1} parent=11 // pred_check
        %p137 = pneg %p91
      $region18: #{fc_with_conv.1} parent=11 // pred_check_branch
        %139 = sbr.rel (%p137) target = $region20
      $region19: #{fc_with_conv.1} parent=11 // pred_region
        _
      $region20: #{fc_with_conv.1} parent=11 // pred_fallthru
        _
    $region12: #{fc_with_conv.1} parent=5 // pred_fallthru
      _
    %p140 = scmp.lt.s32.totalorder %s9, 2
    // Predicated region
    $region21: #{fc_with_conv.1} parent=5 // pred_check
      %p141 = pneg %p140
    $region22: #{fc_with_conv.1} parent=5 // pred_check_branch
      %143 = sbr.rel (%p141) target = $region24
    $region23: #{fc_with_conv.1} parent=5 // pred_region
      // Predicated region
      $region25: #{fc_with_conv.1} parent=23 // pred_check
        %p144 = pneg %p43
      $region26: #{fc_with_conv.1} parent=23 // pred_check_branch
        %146 = sbr.rel (%p144) target = $region28
      $region27: #{fc_with_conv.1} parent=23 // pred_region
        %s147 = smul.u32 2, %s16
        %p148 = scmp.lt.s32.totalorder %s17, 1
        %s149 = scalar_select %p148, %s17, 1
        %p150 = scmp.lt.s32.totalorder %s147, 1
        %s151 = scalar_select %p150, %s147, 1
        %s152 = smul.addr %s149, 2
        %s153 = sadd.s32 %s151, %s152
        %s154 = smul.addr %s153, 4
        %s155 = scalar_lea.vmem %s0, %s154
        %s156 = smul.u32 2, %s16
      $region28: #{fc_with_conv.1} parent=23 // pred_fallthru
        _
    $region24: #{fc_with_conv.1} parent=5 // pred_fallthru
      _
    %p157 = scmp.le.s32.totalorder 1, %s9
    %p158 = scmp.lt.s32.totalorder %s9, 3
    %p159 = pnand %p157, %p158
    %p160 = pneg %p159
    // Predicated region
    $region29: #{fc_with_conv.1} parent=5 // pred_check
      _
    $region30: #{fc_with_conv.1} parent=5 // pred_check_branch
      %162 = sbr.rel (%p159) target = $region32
    $region31: #{fc_with_conv.1} parent=5 // pred_region
      %s163 = ssub.s32 %s9, 1
      %s164 = smul.u32 2, %s18
      %p165 = scmp.lt.s32.totalorder %s19, 1
      %s166 = scalar_select %p165, %s19, 1
      %p167 = scmp.lt.s32.totalorder %s164, 1
      %s168 = scalar_select %p167, %s164, 1
      %s169 = smul.addr %s166, 2
      %s170 = sadd.s32 %s168, %s169
      %s171 = smul.addr %s170, 4
      %s172 = scalar_lea.vmem %s0, %s171
      %p173 = pneg %p49
      %p174 = pneg %p46
      %p175 = pneg %p70
      %p176 = pneg %p67
      %p177 = pneg %p91
      %p178 = pneg %p88
      %p179 = pneg %p119
      %p180 = pneg %p116
      %s181 = smul.u32 2, %s18
      %p182 = scmp.lt.s32.totalorder %s19, 1
      %s183 = scalar_select %p182, %s19, 1
      %p184 = scmp.lt.s32.totalorder %s181, 1
      %s185 = scalar_select %p184, %s181, 1
      %s186 = smul.addr %s183, 2
      %s187 = sadd.s32 %s185, %s186
      %s188 = smul.addr %s187, 8
      %s189 = scalar_lea.vmem %s3, %s188
      %s190 = smul.u32 2, %s18
      %p191 = scmp.lt.s32.totalorder %s19, 1
      %s192 = scalar_select %p191, %s19, 1
      %p193 = scmp.lt.s32.totalorder %s190, 1
      %s194 = scalar_select %p193, %s190, 1
      %s195 = smul.addr %s192, 2
      %s196 = sadd.s32 %s194, %s195
      %s197 = smul.addr %s196, 4
      %s198 = scalar_lea.vmem %s0, %s197
      %s199 = smul.u32 2, %s18
      %s200 = smul.u32 2, %s18
      %p201 = scmp.lt.s32.totalorder %s19, 1
      %s202 = scalar_select %p201, %s19, 1
      %p203 = scmp.lt.s32.totalorder %s200, 1
      %s204 = scalar_select %p203, %s200, 1
      %s205 = smul.addr %s202, 2
      %s206 = sadd.s32 %s204, %s205
      %s207 = smul.addr %s206, 8
      %s208 = scalar_lea.vmem %s3, %s207
      %s209 = smul.u32 2, %s18
      %v210 = vld [vmem:[%s1] sm:$0xff]
      %v211 = vld [vmem:[%s198] sm:$0xff]
      %v212 = vld [vmem:[%s2] sm:$0xff]
      %214 = vset.pattern.permute.xlu0 0
      %215 = vperm.xlu0 %214, %v212
      %v216 = vpop.permute.xlu0 %215
      %v219 = vcombine.high %v211, %v211
      %vm220 = vcmask 31744
      %v222 = vsel %vm220, %v210, 0
      %vm224 = vcmask 1043456
      %v225 = vsel %vm224, %v211, 0
      %v227 = vsel %vm224, %v219, 0
      %229 = vmatprep.subr.mxu0 %v227
      %230 = vmatpush1.msra.mxu0 %v225
      %231 = vmatprep.subr.mxu0 0.0
      %232 = vmatpush1.msra.mxu0 0.0
      %233 = vmatprep.subr.mxu0 0.0
      %234 = vmatpush1.msra.mxu0 0.0
      %235 = vmatprep.subr.mxu0 0.0
      %236 = vmatpush1.msra.mxu0 0.0
      %237 = vmatprep.subr.mxu0 0.0
      %238 = vmatpush1.msra.mxu0 0.0
      %239 = vmatprep.subr.mxu0 0.0
      %240 = vmatpush1.msra.mxu0 0.0
      %241 = vmatprep.subr.mxu0 0.0
      %242 = vmatpush1.msra.mxu0 0.0
      %243 = vmatprep.subr.mxu0 0.0
      %244 = vmatpush1.msra.mxu0 0.0
      %245 = vmatprep.subr.mxu0 0.0
      %246 = vmatpush1.msra.mxu0 0.0
      %247 = vmatprep.subr.mxu0 0.0
      %248 = vmatpush1.msra.mxu0 0.0
      %249 = vmatprep.subr.mxu0 0.0
      %250 = vmatpush1.msra.mxu0 0.0
      %251 = vmatprep.subr.mxu0 0.0
      %252 = vmatpush1.msra.mxu0 0.0
      %253 = vmatprep.subr.mxu0 0.0
      %254 = vmatpush1.msra.mxu0 0.0
      %255 = vmatprep.subr.mxu0 0.0
      %256 = vmatpush1.msra.mxu0 0.0
      %257 = vmatprep.subr.mxu0 0.0
      %258 = vmatpush1.msra.mxu0 0.0
      %259 = vmatprep.subr.mxu0 0.0
      %260 = vmatpush1.msra.mxu0 0.0
      %261 = vmatprep.subr.mxu0 0.0
      %262 = vmatpush1.msra.mxu0 0.0
      %263 = vmatprep.subr.mxu0 0.0
      %264 = vmatpush1.msra.mxu0 0.0
      %265 = vmatprep.subr.mxu0 0.0
      %266 = vmatpush1.msra.mxu0 0.0
      %267 = vmatprep.subr.mxu0 0.0
      %268 = vmatpush1.msra.mxu0 0.0
      %269 = vmatprep.subr.mxu0 0.0
      %270 = vmatpush1.msra.mxu0 0.0
      %271 = vmatprep.subr.mxu0 0.0
      %272 = vmatpush1.msra.mxu0 0.0
      %273 = vmatprep.subr.mxu0 0.0
      %274 = vmatpush1.msra.mxu0 0.0
      %275 = vmatprep.subr.mxu0 0.0
      %276 = vmatpush1.msra.mxu0 0.0
      %277 = vmatprep.subr.mxu0 0.0
      %278 = vmatpush1.msra.mxu0 0.0
      %279 = vmatprep.subr.mxu0 0.0
      %280 = vmatpush1.msra.mxu0 0.0
      %281 = vmatprep.subr.mxu0 0.0
      %282 = vmatpush1.msra.mxu0 0.0
      %283 = vmatprep.subr.mxu0 0.0
      %284 = vmatpush1.msra.mxu0 0.0
      %285 = vmatprep.subr.mxu0 0.0
      %286 = vmatpush1.msra.mxu0 0.0
      %287 = vmatprep.subr.mxu0 0.0
      %288 = vmatpush1.msra.mxu0 0.0
      %289 = vmatprep.subr.mxu0 0.0
      %290 = vmatpush1.msra.mxu0 0.0
      %291 = vmatprep.subr.mxu0 0.0
      %292 = vmatpush1.msra.mxu0 0.0
      %293 = vmatprep.mubr.f32.mxu0 0.0
      %294 = vmatmul.mubr.f32.gmra.mrb[0].mxu0 %v222
      %v295 = vpop.f32.mrb[0].mxu0
      %v296 = vadd.f32 %v216, %v295
      %v297 = vpop.f32.mrb[0].mxu0
      %v298 = vadd.f32 %v216, %v297
      %299 = vdwg.mxu0
      %300 = vst [vmem:[%s208] sm:$0xff] %v296
      %301 = vst [vmem:[%s208 + $0x8] sm:$0xff] %v298
      %s302 = smul.u32 2, %s18
      %p303 = scmp.lt.s32.totalorder %s19, 1
      %s304 = scalar_select %p303, %s19, 1
      %p305 = scmp.lt.s32.totalorder %s302, 1
      %s306 = scalar_select %p305, %s302, 1
      %s307 = smul.addr %s304, 2
      %s308 = sadd.s32 %s306, %s307
      %s309 = smul.addr %s308, 8
      %s310 = scalar_lea.vmem %s3, %s309
      // Predicated region
      $region33: #{fc_with_conv.1} parent=31 // pred_check
        %p311 = pneg %p116
      $region34: #{fc_with_conv.1} parent=31 // pred_check_branch
        %313 = sbr.rel (%p311) target = $region36
      $region35: #{fc_with_conv.1} parent=31 // pred_region
        %s314 = smul.u32 2, %s18
      $region36: #{fc_with_conv.1} parent=31 // pred_fallthru
        _
    $region32: #{fc_with_conv.1} parent=5 // pred_fallthru
      _
    %p315 = scmp.le.s32.totalorder 2, %s9
    // Predicated region
    $region37: #{fc_with_conv.1} parent=5 // pred_check
      %p316 = pneg %p315
    $region38: #{fc_with_conv.1} parent=5 // pred_check_branch
      %318 = sbr.rel (%p316) target = $region40
    $region39: #{fc_with_conv.1} parent=5 // pred_region
      %s319 = ssub.s32 %s9, 2
      // Predicated region
      $region41: #{fc_with_conv.1} parent=39 // pred_check
        %p320 = pneg %p122
      $region42: #{fc_with_conv.1} parent=39 // pred_check_branch
        %322 = sbr.rel (%p320) target = $region44
      $region43: #{fc_with_conv.1} parent=39 // pred_region
        %s323 = smul.u32 2, %s20
        %p324 = scmp.lt.s32.totalorder %s21, 1
        %s325 = scalar_select %p324, %s21, 1
        %p326 = scmp.lt.s32.totalorder %s323, 1
        %s327 = scalar_select %p326, %s323, 1
        %s328 = smul.addr %s325, 2
        %s329 = sadd.s32 %s327, %s328
        %s330 = smul.addr %s329, 8
        %s331 = scalar_lea.vmem %s3, %s330
      $region44: #{fc_with_conv.1} parent=39 // pred_fallthru
        _
    $region40: #{fc_with_conv.1} parent=5 // pred_fallthru
      _
  $region6: #{fc_with_conv.1} parent=0 // loop_footer
    %s13 = sadd.s32 1, %s9
  $region7: #{fc_with_conv.1} parent=0 // loop_footer_branch
    %8 = sbr.rel target = $region3
  $region8: #{fc_with_conv.1} parent=0 // loop_exit
    _

</llo_original>
